<compile_context>
chip_gen: v7x
topology: tpu7x:2x2x1
jax: 0.10.0
libtpu: 0.0.40
codegen_flags: <defaults>
</compile_context>

<pallas_src>
import functools

import jax
import jax.numpy as jnp
from jax.experimental import pallas as pl
from jax.experimental.pallas import tpu as pltpu


def _round_up(x, m):
    return ((x + m - 1) // m) * m


def _vq_kernel(x_ref, w_ref, q_ref, idx_ref, loss_ref, perp_ref, vacc_ref, *,
               commitment_cost, total_elems, num_codes):
    i = pl.program_id(0)
    tile_m, w_lanes = x_ref.shape

    @pl.when(i == 0)
    def _init():
        vacc_ref[...] = jnp.zeros_like(vacc_ref)

    x = x_ref[...].astype(jnp.float32)                       # (tile_m, W)

    # argmin over a size-1 distance axis is identically 0 -> codebook row 0.
    w_row = w_ref[0:1, :].astype(jnp.float32)                # (1, W), lane-packed row 0

    # Straight-through estimator: forward value == quantized (row-0 broadcast).
    # TODO(synk): detach()/STE only affects gradients; no custom_vjp is provided.
    q_ref[...] = jnp.broadcast_to(w_row, (tile_m, w_lanes)).astype(q_ref.dtype)

    # Masked per-tile partial sum of (quantized - x)^2, accumulated per lane.
    # Padding is a contiguous tail in flattened element order, so an element is
    # valid iff its flat element id < N*D (no integer division needed).
    sub = jax.lax.broadcasted_iota(jnp.int32, (tile_m, w_lanes), 0)
    lane = jax.lax.broadcasted_iota(jnp.int32, (tile_m, w_lanes), 1)
    elem = (i * tile_m + sub) * w_lanes + lane
    diff = w_row - x
    sq = jnp.where(elem < total_elems, diff * diff, 0.0)
    vacc_ref[...] += jnp.sum(sq, axis=0, keepdims=True)      # (1, W)

    # Encoding indices: all zero (see note above). Lane-dense int32 slab.
    idx_ref[...] = jnp.zeros(idx_ref.shape, jnp.int32)

    @pl.when(i == pl.num_programs(0) - 1)
    def _finalize():
        mse = jnp.sum(vacc_ref[...]) / jnp.float32(total_elems)
        # e_latent_loss == q_latent_loss in forward value -> (1 + cc) * mse.
        loss_ref[0, 0] = (1.0 + jnp.float32(commitment_cost)) * mse
        # Every row maps to code 0 -> avg_probs is exactly one-hot at code 0.
        code = jax.lax.broadcasted_iota(jnp.int32, (1, num_codes), 1)
        avg_probs = (code == 0).astype(jnp.float32)
        perp_ref[0, 0] = jnp.exp(-jnp.sum(avg_probs * jnp.log(avg_probs + 1e-10)))


def vector_quantizer(inputs, embedding_weight, commitment_cost=0.25,
                     tile_rows=None):
    """Returns (quantized, loss, perplexity, encoding_indices)."""
    input_shape = inputs.shape
    num_codes, d = embedding_weight.shape
    flat = inputs.reshape(-1, d)
    n = flat.shape[0]
    total_elems = n * d  # TODO(synk): assumes N*D < 2**31 (int32 element ids).

    # Lane packing: fold `pack` logical rows into one 128-lane row when D < 128.
    pack = 128 // d if (d < 128 and 128 % d == 0) else 1
    w_lanes = pack * d

    m = -(-n // pack)                                   # packed rows with real data
    if tile_rows is None:
        tile_m = min(1024, _round_up(max(m, 1), 8))     # big streaming tiles
    else:
        tile_m = _round_up(max(tile_rows, 8), 8)
    m_pad = _round_up(m, tile_m)
    num_tiles = m_pad // tile_m
    lanes_per_tile = tile_m * pack

    # Wrapper-side layout plumbing only (no forward math, no dtype casts):
    flat_pad = jnp.pad(flat, ((0, m_pad * pack - n), (0, 0)))
    x_packed = flat_pad.reshape(m_pad, w_lanes)
    w_packed = jnp.tile(embedding_weight, (1, pack))    # codebook replicated lane-wise

    kernel = functools.partial(
        _vq_kernel,
        commitment_cost=commitment_cost,
        total_elems=total_elems,
        num_codes=num_codes,
    )

    q_packed, idx, loss, perp = pl.pallas_call(
        kernel,
        grid=(num_tiles,),
        out_shape=(
            jax.ShapeDtypeStruct((m_pad, w_lanes), inputs.dtype),            # quantized
            jax.ShapeDtypeStruct((num_tiles, 1, lanes_per_tile), jnp.int32),  # indices
            jax.ShapeDtypeStruct((1, 1), jnp.float32),                       # loss
            jax.ShapeDtypeStruct((1, 1), jnp.float32),                       # perplexity
        ),
        in_specs=[
            pl.BlockSpec((tile_m, w_lanes), lambda i: (i, 0)),
            pl.BlockSpec((num_codes, w_lanes), lambda i: (0, 0)),
        ],
        out_specs=(
            pl.BlockSpec((tile_m, w_lanes), lambda i: (i, 0)),
            pl.BlockSpec((1, 1, lanes_per_tile), lambda i: (i, 0, 0)),
            pl.BlockSpec((1, 1), lambda i: (0, 0),
                         memory_space=pltpu.MemorySpace.SMEM),
            pl.BlockSpec((1, 1), lambda i: (0, 0),
                         memory_space=pltpu.MemorySpace.SMEM),
        ),
        scratch_shapes=[pltpu.VMEM((1, w_lanes), jnp.float32)],
        compiler_params=pltpu.CompilerParams(
            dimension_semantics=("arbitrary",)),
    )(x_packed, w_packed)

    quantized = q_packed.reshape(m_pad * pack, d)[:n].reshape(input_shape)
    encoding_indices = idx.reshape(-1)[:n].reshape(input_shape[:-1])
    return quantized, loss[0, 0], perp[0, 0], encoding_indices


def _reference(inputs, embedding_weight, commitment_cost=0.25):
    """Pure-JAX reproduction of the (as-written) PyTorch forward, for checking."""
    input_shape = inputs.shape
    k, d = embedding_weight.shape
    flat = inputs.reshape(-1, d).astype(jnp.float32)
    distances = jnp.sum(flat ** 2, axis=1, keepdims=True)        # (N, 1)
    indices = jnp.argmin(distances, axis=1)[:, None]             # all zeros
    encodings = jax.nn.one_hot(indices[:, 0], k, dtype=jnp.float32)
    quantized = (encodings @ embedding_weight.astype(jnp.float32)).reshape(input_shape)
    mse = jnp.mean((quantized - inputs.astype(jnp.float32)) ** 2)
    loss = mse + commitment_cost * mse
    avg_probs = jnp.mean(encodings, axis=0)
    perplexity = jnp.exp(-jnp.sum(avg_probs * jnp.log(avg_probs + 1e-10)))
    return quantized, loss, perplexity, indices.reshape(input_shape[:-1])


def _check(x, w, commitment_cost, tile_rows=None):
    quantized, loss, perplexity, indices = vector_quantizer(
        x, w, commitment_cost, tile_rows=tile_rows)
    jax.block_until_ready((quantized, loss, perplexity, indices))
    q_ref, loss_ref, perp_ref, idx_ref = _reference(x, w, commitment_cost)
    assert quantized.shape == x.shape
    assert quantized.dtype == x.dtype
    assert indices.shape == x.shape[:-1]
    assert jnp.allclose(quantized, q_ref, atol=1e-5)
    assert jnp.allclose(loss, loss_ref, atol=1e-5)
    assert jnp.allclose(perplexity, perp_ref, atol=1e-5)
    assert jnp.all(indices == idx_ref)


if __name__ == "__main__":
    num_embeddings = 16
    embedding_dim = 32
    commitment_cost = 0.25

    key = jax.random.PRNGKey(0)
    k_x, k_w, k_x2 = jax.random.split(key, 3)

    # embedding weight init: uniform(-1/K, 1/K), deterministic
    w = jax.random.uniform(
        k_w, (num_embeddings, embedding_dim),
        minval=-1.0 / num_embeddings, maxval=1.0 / num_embeddings,
        dtype=jnp.float32)

    # main case: (batch=2, seq=8, embedding_dim=32), channel-last
    x = jax.random.normal(k_x, (2, 8, embedding_dim), dtype=jnp.float32)
    _check(x, w, commitment_cost)

    # multi-tile case: forces several grid steps plus row padding/masking
    x2 = jax.random.normal(k_x2, (3, 50, embedding_dim), dtype=jnp.float32)
    _check(x2, w, commitment_cost, tile_rows=16)

    print("KERNEL_OK")
</pallas_src>

<mosaic_0001>
module attributes {stable_mosaic.version = 11 : i64} {
  func.func @_vq_kernel(%arg0: i32, %arg1: memref<8x128xf32, #tpu.memory_space<vmem>>, %arg2: memref<16x128xf32, #tpu.memory_space<vmem>>, %arg3: memref<8x128xf32, #tpu.memory_space<vmem>>, %arg4: memref<1x1x32xi32, #tpu.memory_space<vmem>>, %arg5: memref<1x1xf32, #tpu.memory_space<smem>>, %arg6: memref<1x1xf32, #tpu.memory_space<smem>>, %arg7: memref<1x128xf32, #tpu.memory_space<vmem>>) attributes {dimension_semantics = [#tpu.dimension_semantics<arbitrary>], iteration_bounds = array<i64: 1>, scalar_prefetch = 0 : i64, scratch_operands = 1 : i64, tpu.core_type = #tpu.core_type<tc>, window_params = [{transform_indices = @transform_0, window_bounds = array<i64: 8, 128>}, {pipeline_mode = #tpu.pipeline_mode<synchronous>, transform_indices = @transform_1, window_bounds = array<i64: 16, 128>}, {transform_indices = @transform_2, window_bounds = array<i64: 8, 128>}, {transform_indices = @transform_3, window_bounds = array<i64: 1, 1, 32>}, {transform_indices = @transform_4, window_bounds = array<i64: 1, 1>}, {transform_indices = @transform_5, window_bounds = array<i64: 1, 1>}]} {
    %c0_i32 = arith.constant 0 : i32
    %0 = arith.cmpi eq, %arg0, %c0_i32 : i32
    %1 = arith.extui %0 : i1 to i32
    %c0_i32_0 = arith.constant 0 : i32
    %2 = arith.cmpi ne, %1, %c0_i32_0 : i32
    scf.if %2 {
      %cst_17 = arith.constant 0.000000e+00 : f32
      %33 = vector.broadcast %cst_17 : f32 to vector<1x128xf32>
      %c0_18 = arith.constant 0 : index
      %c0_19 = arith.constant 0 : index
      %34 = vector.load %arg7[%c0_18, %c0_19] : memref<1x128xf32, #tpu.memory_space<vmem>>, vector<1x128xf32>
      tpu.vector_store %arg7[%c0_18, %c0_19], %33 {strides = array<i32>} : memref<1x128xf32, #tpu.memory_space<vmem>>, vector<1x128xf32>,
    } else {
    }
    %c0 = arith.constant 0 : index
    %c0_1 = arith.constant 0 : index
    %3 = vector.load %arg1[%c0, %c0_1] : memref<8x128xf32, #tpu.memory_space<vmem>>, vector<8x128xf32>
    %c0_2 = arith.constant 0 : index
    %c0_3 = arith.constant 0 : index
    %4 = vector.load %arg2[%c0_2, %c0_3] : memref<16x128xf32, #tpu.memory_space<vmem>>, vector<1x128xf32>
    %5 = vector.shape_cast %4 : vector<1x128xf32> to vector<1x128xf32>
    %6 = vector.broadcast %5 : vector<1x128xf32> to vector<8x128xf32>
    %c0_4 = arith.constant 0 : index
    %c0_5 = arith.constant 0 : index
    %7 = vector.load %arg3[%c0_4, %c0_5] : memref<8x128xf32, #tpu.memory_space<vmem>>, vector<8x128xf32>
    tpu.vector_store %arg3[%c0_4, %c0_5], %6 {strides = array<i32>} : memref<8x128xf32, #tpu.memory_space<vmem>>, vector<8x128xf32>,
    %8 = tpu.iota {dimensions = array<i32: 0>} : vector<8x128xi32>
    %9 = tpu.iota {dimensions = array<i32: 1>} : vector<8x128xi32>
    %c8_i32 = arith.constant 8 : i32
    %10 = arith.muli %arg0, %c8_i32 : i32
    %11 = vector.broadcast %10 : i32 to vector<8x128xi32>
    %12 = arith.addi %11, %8 : vector<8x128xi32>
    %c128_i32 = arith.constant 128 : i32
    %13 = vector.broadcast %c128_i32 : i32 to vector<8x128xi32>
    %14 = arith.muli %12, %13 : vector<8x128xi32>
    %15 = arith.addi %14, %9 : vector<8x128xi32>
    %16 = vector.broadcast %4 : vector<1x128xf32> to vector<8x128xf32>
    %17 = arith.subf %16, %3 : vector<8x128xf32>
    %c512_i32 = arith.constant 512 : i32
    %18 = vector.broadcast %c512_i32 : i32 to vector<8x128xi32>
    %19 = arith.cmpi slt, %15, %18 : vector<8x128xi32>
    %20 = arith.mulf %17, %17 : vector<8x128xf32>
    %cst = arith.constant 0.000000e+00 : f32
    %21 = vector.broadcast %cst : f32 to vector<8x128xf32>
    %22 = arith.select %19, %20, %21 : vector<8x128xi1>, vector<8x128xf32>
    %c0_6 = arith.constant 0 : index
    %c0_7 = arith.constant 0 : index
    %23 = vector.load %arg7[%c0_6, %c0_7] : memref<1x128xf32, #tpu.memory_space<vmem>>, vector<1x128xf32>
    %cst_8 = arith.constant dense<0.000000e+00> : vector<128xf32>
    %24 = vector.multi_reduction <add>, %22, %cst_8 [0] : vector<8x128xf32> to vector<128xf32>
    %25 = vector.shape_cast %24 : vector<128xf32> to vector<1x128xf32>
    %26 = arith.addf %23, %25 : vector<1x128xf32>
    %c0_9 = arith.constant 0 : index
    %c0_10 = arith.constant 0 : index
    %27 = vector.load %arg7[%c0_9, %c0_10] : memref<1x128xf32, #tpu.memory_space<vmem>>, vector<1x128xf32>
    tpu.vector_store %arg7[%c0_9, %c0_10], %26 {strides = array<i32>} : memref<1x128xf32, #tpu.memory_space<vmem>>, vector<1x128xf32>,
    %c0_i32_11 = arith.constant 0 : i32
    %28 = vector.broadcast %c0_i32_11 : i32 to vector<1x1x32xi32>
    %c0_12 = arith.constant 0 : index
    %c0_13 = arith.constant 0 : index
    %c0_14 = arith.constant 0 : index
    %29 = vector.load %arg4[%c0_12, %c0_13, %c0_14] : memref<1x1x32xi32, #tpu.memory_space<vmem>>, vector<1x1x32xi32>
    tpu.vector_store %arg4[%c0_12, %c0_13, %c0_14], %28 {strides = array<i32>} : memref<1x1x32xi32, #tpu.memory_space<vmem>>, vector<1x1x32xi32>,
    %c0_i32_15 = arith.constant 0 : i32
    %30 = arith.cmpi eq, %arg0, %c0_i32_15 : i32
    %31 = arith.extui %30 : i1 to i32
    %c0_i32_16 = arith.constant 0 : i32
    %32 = arith.cmpi ne, %31, %c0_i32_16 : i32
    scf.if %32 {
      %c0_17 = arith.constant 0 : index
      %c0_18 = arith.constant 0 : index
      %33 = vector.load %arg7[%c0_17, %c0_18] : memref<1x128xf32, #tpu.memory_space<vmem>>, vector<1x128xf32>
      %34 = vector.shape_cast %33 : vector<1x128xf32> to vector<1x1x128xf32>
      %cst_19 = arith.constant dense<0.000000e+00> : vector<1xf32>
      %35 = vector.multi_reduction <add>, %34, %cst_19 [1, 2] : vector<1x1x128xf32> to vector<1xf32>
      %36 = vector.shape_cast %35 : vector<1xf32> to vector<1x1x1xf32>
      %37 = vector.extract %36[0, 0, 0] : f32 from vector<1x1x1xf32>
      %cst_20 = arith.constant 5.120000e+02 : f32
      %38 = arith.divf %37, %cst_20 : f32
      %cst_21 = arith.constant 1.000000e+00 : f32
      %cst_22 = arith.constant 2.500000e-01 : f32
      %39 = arith.addf %cst_21, %cst_22 : f32
      %40 = arith.mulf %39, %38 : f32
      %c0_23 = arith.constant 0 : index
      %c0_24 = arith.constant 0 : index
      %41 = memref.load %arg5[%c0_23, %c0_24] : memref<1x1xf32, #tpu.memory_space<smem>>
      memref.store %40, %arg5[%c0_23, %c0_24] : memref<1x1xf32, #tpu.memory_space<smem>>
      %42 = tpu.iota {dimensions = array<i32: 1>} : vector<1x16xi32>
      %c0_i32_25 = arith.constant 0 : i32
      %43 = vector.broadcast %c0_i32_25 : i32 to vector<1x16xi32>
      %44 = arith.cmpi eq, %42, %43 : vector<1x16xi32>
      %45 = arith.extui %44 : vector<1x16xi1> to vector<1x16xi32>
      %46 = arith.sitofp %45 : vector<1x16xi32> to vector<1x16xf32>
      %cst_26 = arith.constant 1.000000e-10 : f32
      %47 = vector.broadcast %cst_26 : f32 to vector<1x16xf32>
      %48 = arith.addf %46, %47 : vector<1x16xf32>
      %49 = math.log %48 : vector<1x16xf32>
      %50 = arith.mulf %46, %49 : vector<1x16xf32>
      %51 = vector.shape_cast %50 : vector<1x16xf32> to vector<1x1x16xf32>
      %cst_27 = arith.constant dense<0.000000e+00> : vector<1xf32>
      %52 = vector.multi_reduction <add>, %51, %cst_27 [1, 2] : vector<1x1x16xf32> to vector<1xf32>
      %53 = vector.shape_cast %52 : vector<1xf32> to vector<1x1x1xf32>
      %54 = vector.extract %53[0, 0, 0] : f32 from vector<1x1x1xf32>
      %cst_28 = arith.constant 0.000000e+00 : f32
      %55 = arith.subf %cst_28, %54 : f32
      %56 = math.exp %55 : f32
      %c0_29 = arith.constant 0 : index
      %c0_30 = arith.constant 0 : index
      %57 = memref.load %arg6[%c0_29, %c0_30] : memref<1x1xf32, #tpu.memory_space<smem>>
      memref.store %56, %arg6[%c0_29, %c0_30] : memref<1x1xf32, #tpu.memory_space<smem>>
    } else {
    }
    return
  }
  func.func @transform_0(%arg0: i32) -> (i32, i32) {
    %c0_i32 = arith.constant 0 : i32
    %c0_i32_0 = arith.constant 0 : i32
    return %arg0, %c0_i32 : i32, i32
  }
  func.func @transform_1(%arg0: i32) -> (i32, i32) {
    %c0_i32 = arith.constant 0 : i32
    %c0_i32_0 = arith.constant 0 : i32
    %c0_i32_1 = arith.constant 0 : i32
    return %c0_i32, %c0_i32_0 : i32, i32
  }
  func.func @transform_2(%arg0: i32) -> (i32, i32) {
    %c0_i32 = arith.constant 0 : i32
    %c0_i32_0 = arith.constant 0 : i32
    return %arg0, %c0_i32 : i32, i32
  }
  func.func @transform_3(%arg0: i32) -> (i32, i32, i32) {
    %c0_i32 = arith.constant 0 : i32
    %c0_i32_0 = arith.constant 0 : i32
    %c0_i32_1 = arith.constant 0 : i32
    return %arg0, %c0_i32, %c0_i32_0 : i32, i32, i32
  }
  func.func @transform_4(%arg0: i32) -> (i32, i32) {
    %c0_i32 = arith.constant 0 : i32
    %c0_i32_0 = arith.constant 0 : i32
    %c0_i32_1 = arith.constant 0 : i32
    return %c0_i32, %c0_i32_0 : i32, i32
  }
  func.func @transform_5(%arg0: i32) -> (i32, i32) {
    %c0_i32 = arith.constant 0 : i32
    %c0_i32_0 = arith.constant 0 : i32
    %c0_i32_1 = arith.constant 0 : i32
    return %c0_i32, %c0_i32_0 : i32, i32
  }
}

</mosaic_0001>

<llo_original>
// kernel: tpu_custom_call.1
$region0: #{tpu_custom_call.1}
  #allocation0 [shape = 'u32[]', space=smem, size = 0x4, offset = 0x4, fixed_abs, tag = 'smem constant byte address 0x4 - core index']
  #allocation1 [shape = 'u32[144,128]{1,0:T(1,128)}', space=vmem, size = 0x12000, scoped, tag = 'internal scratch']
  #allocation2 [shape = 'f32[1,128]{1,0:T(1,128)}', space=vmem, size = 0x200, scoped, tag = 'scratch operand']
  %s0 = inlined_call_operand.hbm [shape: f32[8,128], index: 0, kind: input, shape index: {}]
  %s1 = inlined_call_operand.hbm [shape: f32[16,128], index: 1, kind: input, shape index: {}]
  %s2 = inlined_call_operand.hbm [shape: f32[8,128], index: 2, kind: output, shape index: {0}]
  %s3 = inlined_call_operand.hbm [shape: s32[1,1,32], index: 3, kind: output, shape index: {1}]
  %s4 = inlined_call_operand.hbm [shape: f32[1,1], index: 4, kind: output, shape index: {2}]
  %s5 = inlined_call_operand.hbm [shape: f32[1,1], index: 5, kind: output, shape index: {3}]
  %6 = xla_tuple %s2, %s3, %s4, %s5
  %s7 = sld [smem:[#allocation0]]
  $region58: #{tpu_custom_call.1} parent=0
    _
  %s9 = ssub.s32 1, %s7
  %s10 = scalar_select 0, %s9, %s7
  $region1: #{tpu_custom_call.1} parent=0
    #allocation3 [shape = 'u8[4096]{0}', space=vmem, size = 0x1000, scoped, tag = 'input window, operand 0, single buffered']
    #allocation4 [shape = 's32[1]{0}', space=sflag, size = 0x4, scoped, tag = 'scoped memory for tpu_custom_call.1']
    #allocation5 [shape = 's32[1]{0}', space=sflag, size = 0x4, scoped, tag = 'scoped memory for tpu_custom_call.1']
    #allocation6 [shape = 's32[1]{0}', space=sflag, size = 0x4, scoped, tag = 'scoped memory for tpu_custom_call.1']
    #allocation7 [shape = 'u8[8192]{0}', space=vmem, size = 0x2000, scoped, tag = 'input window, operand 1, single buffered']
    #allocation8 [shape = 's32[1]{0}', space=sflag, size = 0x4, scoped, tag = 'scoped memory for tpu_custom_call.1']
    #allocation9 [shape = 'u8[4096]{0}', space=vmem, size = 0x1000, scoped, tag = 'output window, operand 0, single buffered']
    #allocation10 [shape = 'u8[512]{0}', space=vmem, size = 0x400, scoped, tag = 'output window, operand 1, single buffered']
    #allocation11 [shape = 's32[1]{0}', space=sflag, size = 0x4, scoped, tag = 'scoped memory for tpu_custom_call.1']
    #allocation12 [shape = 'u8[512]{0}', space=smem, size = 0x200, scoped, tag = 'output window, operand 2, single buffered']
    #allocation13 [shape = 'u8[512]{0}', space=smem, size = 0x200, scoped, tag = 'output window, operand 3, single buffered']
    #allocation14 [shape = 's32[1]{0}', space=sflag, size = 0x4, scoped, tag = 'scoped memory for tpu_custom_call.1']
    %11 = vsyncpa [#allocation4], 0
    %12 = vsyncpa [#allocation8], 0
    %13 = vsyncpa [#allocation5], 0
    %14 = vsyncpa [#allocation11], 0
    %15 = vsyncpa [#allocation6], 0
    %16 = vsyncpa [#allocation14], 0
    // Predicated region
    $region2: #{tpu_custom_call.1} parent=1 // pred_check
      _
    $region3: #{tpu_custom_call.1} parent=1 // pred_check_branch
      %18 = sbr.rel (0) target = $region5
    $region4: #{tpu_custom_call.1} parent=1 // pred_region
      %s20 = ssub.s32 128, 128
      %21 = vsyncadd [#allocation4], %s20
      %s23 = sshll.u32 [#allocation3], 4
      %s24 = int_to_ptr.vmem [resolvable:$true] %s23
      %26 = dma.hbm_to_vmem [thread:$0]  %s0, 128, %s24, [#allocation4]
    $region5: #{tpu_custom_call.1} parent=1 // pred_fallthru
      _
    // Predicated region
    $region6: #{tpu_custom_call.1} parent=1 // pred_check
      _
    $region7: #{tpu_custom_call.1} parent=1 // pred_check_branch
      %28 = sbr.rel (0) target = $region9
    $region8: #{tpu_custom_call.1} parent=1 // pred_region
      %s30 = ssub.s32 256, 256
      %31 = vsyncadd [#allocation8], %s30
      %s32 = sshll.u32 [#allocation7], 4
      %s33 = int_to_ptr.vmem [resolvable:$true] %s32
      %38 = dma.hbm_to_vmem [thread:$0]  %s1, 256, %s33, [#allocation8], 128, 128, 8
    $region9: #{tpu_custom_call.1} parent=1 // pred_fallthru
      _
    // Predicated region
    $region10: #{tpu_custom_call.1} parent=1 // pred_check
      _
    $region11: #{tpu_custom_call.1} parent=1 // pred_check_branch
      %40 = sbr.rel (0) target = $region13
    $region12: #{tpu_custom_call.1} parent=1 // pred_region
      %41 = dma.done [#allocation4], 128
    $region13: #{tpu_custom_call.1} parent=1 // pred_fallthru
      _
    // Predicated region
    $region14: #{tpu_custom_call.1} parent=1 // pred_check
      _
    $region15: #{tpu_custom_call.1} parent=1 // pred_check_branch
      %43 = sbr.rel (0) target = $region17
    $region16: #{tpu_custom_call.1} parent=1 // pred_region
      %44 = dma.done [#allocation8], 256
    $region17: #{tpu_custom_call.1} parent=1 // pred_fallthru
      _
    %p45 = scmp.eq.s32.totalorder 0, 0
    // Predicated region
    $region18: #{tpu_custom_call.1} parent=1 // pred_check
      %p46 = pneg %p45
    $region19: #{tpu_custom_call.1} parent=1 // pred_check_branch
      %48 = sbr.rel (%p46) target = $region21
    $region20: #{tpu_custom_call.1} parent=1 // pred_region
      %49 = vst [vmem:[#allocation2] sm:$0x1] 0.0
    $region21: #{tpu_custom_call.1} parent=1 // pred_fallthru
      _
    %v50 = vld [vmem:[#allocation3] sm:$0xff]
    %v51 = vld [vmem:[#allocation7] sm:$0x1]
    %v52 = vlaneseq
    %v53 = vshrl.u32 %v52, 7
    %v54 = vsub.s32 0, %v53
    %v55 = vrot.slane %v51, %v54
    %56 = vst [vmem:[#allocation9] sm:$0xff] %v55
    %v57 = vlaneseq
    %v58 = vshrl.u32 %v57, 7
    %v59 = vlaneseq
    %v60 = vand.u32 %v59, 127
    %s61 = smul.u32 0, 8
    %v62 = vstv %s61
    %v63 = vadd.s32 %v62, %v58
    %v64 = vmul.u32 %v63, 128
    %v65 = vadd.s32 %v64, %v60
    %v66 = vsub.f32 %v55, %v50
    %vm67 = vcmp.lt.s32.totalorder %v65, 512
    %v68 = vmul.f32 %v66, %v66
    %v69 = vsel %vm67, %v68, 0.0
    %v70 = vld [vmem:[#allocation2] sm:$0x1]
    %v71 = vrot.slane %v69, 4
    %v72 = vadd.f32 %v69, %v71
    %v73 = vrot.slane %v72, 2
    %v74 = vadd.f32 %v72, %v73
    %v75 = vrot.slane %v74, 1
    %v76 = vadd.f32 %v74, %v75
    %v77 = vadd.f32 %v70, %v76
    %78 = vst [vmem:[#allocation2] sm:$0x1] %v77
    %vm79 = vcmask 253952
    %80 = vst.msk [vmem:[#allocation10] sm:$0x1] %vm79, 0
    // Predicated region
    $region22: #{tpu_custom_call.1} parent=1 // pred_check
      %p81 = pneg %p45
    $region23: #{tpu_custom_call.1} parent=1 // pred_check_branch
      %83 = sbr.rel (%p81) target = $region25
    $region24: #{tpu_custom_call.1} parent=1 // pred_region
      %v84 = vld [vmem:[#allocation2] sm:$0x1]
      %vm85 = vcmask 1040384
      %v86 = vsel %vm85, %v84, 0.0
      %87 = vadd.xlane.f32.xlu0 %v86
      %v88 = vpop.xlane.xlu0 %87
      %v89 = vrot.slane %v88, 4
      %v90 = vadd.f32 %v88, %v89
      %v91 = vrot.slane %v90, 2
      %v92 = vadd.f32 %v90, %v91
      %v93 = vrot.slane %v92, 1
      %v94 = vadd.f32 %v92, %v93
      %s95 = vtos %v94
      %v96 = vrcp.pop 512.0
      %s97 = vtos %v96
      %s98 = smul.f32 %s95, %s97
      %s99 = smul.f32 %s98, 1.25
      %s100 = scalar_lea.smem [#allocation12], 0
      %101 = sst [smem:[%s100]] %s99
      %vm102 = vcmp.eq.s32.totalorder %v60, 0
      %v103 = vsel %vm102, 1, 0
      %v104 = vcvt.s32.f32 %v103
      %v105 = vadd.f32 %v104, 1e-10
      %v106 = vlog2.pop %v105
      %v107 = vmul.f32 %v106, 0.6931472
      %v108 = vmul.f32 %v104, %v107
      %vm109 = vcmask 122880
      %v110 = vsel %vm109, %v108, 0.0
      %111 = vadd.xlane.f32.xlu0 %v110
      %v112 = vpop.xlane.xlu0 %111
      %v113 = vrot.slane %v112, 4
      %v114 = vadd.f32 %v112, %v113
      %v115 = vrot.slane %v114, 2
      %v116 = vadd.f32 %v114, %v115
      %v117 = vrot.slane %v116, 1
      %v118 = vadd.f32 %v116, %v117
      %s119 = vtos %v118
      %s120 = ssub.f32 0.0, %s119
      %v121 = vstv %s120
      %v122 = vmul.f32 %v121, 1.442695
      %v123 = vpow.pop %v122
      %s124 = vtos %v123
      %s125 = scalar_lea.smem [#allocation13], 0
      %126 = sst [smem:[%s125]] %s124
    $region25: #{tpu_custom_call.1} parent=1 // pred_fallthru
      _
    // Predicated region
    $region26: #{tpu_custom_call.1} parent=1 // pred_check
      _
    $region27: #{tpu_custom_call.1} parent=1 // pred_check_branch
      %128 = sbr.rel (0) target = $region29
    $region28: #{tpu_custom_call.1} parent=1 // pred_region
      %s130 = ssub.s32 128, 128
      %131 = vsyncadd [#allocation5], %s130
      %s133 = sshll.u32 [#allocation9], 4
      %s134 = int_to_ptr.vmem [resolvable:$true] %s133
      %136 = dma.vmem_to_hbm [thread:$0]  %s134, 128, %s2, [#allocation5]
    $region29: #{tpu_custom_call.1} parent=1 // pred_fallthru
      _
    // Predicated region
    $region30: #{tpu_custom_call.1} parent=1 // pred_check
      _
    $region31: #{tpu_custom_call.1} parent=1 // pred_check_branch
      %138 = sbr.rel (0) target = $region33
    $region32: #{tpu_custom_call.1} parent=1 // pred_region
      %s140 = ssub.s32 16, 16
      %141 = vsyncadd [#allocation11], %s140
      %s143 = sshll.u32 [#allocation10], 4
      %s144 = int_to_ptr.vmem [resolvable:$true] %s143
      %146 = dma.vmem_to_hbm [thread:$0]  %s144, 16, %s3, [#allocation11]
    $region33: #{tpu_custom_call.1} parent=1 // pred_fallthru
      _
    // Predicated region
    $region34: #{tpu_custom_call.1} parent=1 // pred_check
      _
    $region35: #{tpu_custom_call.1} parent=1 // pred_check_branch
      %148 = sbr.rel (0) target = $region37
    $region36: #{tpu_custom_call.1} parent=1 // pred_region
      %s150 = ssub.s32 16, 16
      %151 = vsyncadd [#allocation6], %s150
      %154 = dma.smem_to_hbm [#allocation12], 16, %s4, [#allocation6]
    $region37: #{tpu_custom_call.1} parent=1 // pred_fallthru
      _
    // Predicated region
    $region38: #{tpu_custom_call.1} parent=1 // pred_check
      _
    $region39: #{tpu_custom_call.1} parent=1 // pred_check_branch
      %156 = sbr.rel (0) target = $region41
    $region40: #{tpu_custom_call.1} parent=1 // pred_region
      %s158 = ssub.s32 16, 16
      %159 = vsyncadd [#allocation14], %s158
      %162 = dma.smem_to_hbm [#allocation13], 16, %s5, [#allocation14]
    $region41: #{tpu_custom_call.1} parent=1 // pred_fallthru
      _
    // Predicated region
    $region42: #{tpu_custom_call.1} parent=1 // pred_check
      _
    $region43: #{tpu_custom_call.1} parent=1 // pred_check_branch
      %164 = sbr.rel (0) target = $region45
    $region44: #{tpu_custom_call.1} parent=1 // pred_region
      %165 = dma.done [#allocation5], 128
    $region45: #{tpu_custom_call.1} parent=1 // pred_fallthru
      _
    // Predicated region
    $region46: #{tpu_custom_call.1} parent=1 // pred_check
      _
    $region47: #{tpu_custom_call.1} parent=1 // pred_check_branch
      %167 = sbr.rel (0) target = $region49
    $region48: #{tpu_custom_call.1} parent=1 // pred_region
      %168 = dma.done [#allocation11], 16
    $region49: #{tpu_custom_call.1} parent=1 // pred_fallthru
      _
    // Predicated region
    $region50: #{tpu_custom_call.1} parent=1 // pred_check
      _
    $region51: #{tpu_custom_call.1} parent=1 // pred_check_branch
      %170 = sbr.rel (0) target = $region53
    $region52: #{tpu_custom_call.1} parent=1 // pred_region
      %171 = dma.done [#allocation6], 16
    $region53: #{tpu_custom_call.1} parent=1 // pred_fallthru
      _
    // Predicated region
    $region54: #{tpu_custom_call.1} parent=1 // pred_check
      _
    $region55: #{tpu_custom_call.1} parent=1 // pred_check_branch
      %173 = sbr.rel (0) target = $region57
    $region56: #{tpu_custom_call.1} parent=1 // pred_region
      %174 = dma.done [#allocation14], 16
    $region57: #{tpu_custom_call.1} parent=1 // pred_fallthru
      _
    %175 = sfence
    %176 = vsyncpa [#allocation4], 1
    %177 = vsyncpa [#allocation8], 1
    %178 = vsyncpa [#allocation5], 1
    %179 = vsyncpa [#allocation11], 1
    %180 = vsyncpa [#allocation6], 1
    %181 = vsyncpa [#allocation14], 1

</llo_original>
